<compile_context>
chip_gen: v7x
topology: tpu7x:2x2x1
jax: 0.10.0
libtpu: 0.0.40
codegen_flags: <defaults>
</compile_context>

<pallas_src>
import math
import functools

import jax
import jax.numpy as jnp
from jax import lax
from jax.experimental import pallas as pl
from jax.experimental.pallas import tpu as pltpu


# ---------------------------------------------------------------------------
# Buffer setup (plain JAX glue): sinusoidal pe, same recipe as the module init.
# ---------------------------------------------------------------------------
def make_pe(d_model: int, max_len: int) -> jnp.ndarray:
    position = jnp.arange(max_len, dtype=jnp.float32)[:, None]              # (max_len, 1)
    div_term = jnp.exp(
        jnp.arange(0, d_model, 2, dtype=jnp.float32) * (-math.log(10000.0) / d_model)
    )                                                                       # (d_model//2,)
    ang = position * div_term                                               # (max_len, d_model//2)
    pe = jnp.stack([jnp.sin(ang), jnp.cos(ang)], axis=-1).reshape(max_len, d_model)
    return pe.astype(jnp.float32)                                           # (max_len, d_model)


# ---------------------------------------------------------------------------
# In-kernel helpers (pure jnp/lax int32 ops -> lower on Mosaic and interpret).
# ---------------------------------------------------------------------------
def _i32(v: int):
    """Python int (possibly >= 2**31) -> wrapped int32 constant."""
    return jnp.int32(((v + 2**31) % 2**32) - 2**31)


def _fmix32(x):
    """murmur3-style 32-bit finalizer; int32 arithmetic wraps like uint32."""
    x = x ^ lax.shift_right_logical(x, 16)
    x = x * _i32(0x85EBCA6B)
    x = x ^ lax.shift_right_logical(x, 13)
    x = x * _i32(0xC2B2AE35)
    x = x ^ lax.shift_right_logical(x, 16)
    return x


# ---------------------------------------------------------------------------
# Kernels
# ---------------------------------------------------------------------------
def pe_add_kernel(x_ref, pe_ref, o_ref):
    # eval mode: dropout is identity
    o_ref[...] = x_ref[...] + pe_ref[...]


def pe_add_dropout_kernel(seed_ref, x_ref, pe_ref, o_ref, *,
                          drop_threshold: int, scale: float,
                          tile_rows: int, tile_cols: int, n_cols: int):
    # training mode: dropout(x + pe) with inverted scaling 1/(1-p)
    y = x_ref[...] + pe_ref[...]

    # Stateless counter-based PRNG: hash(seed, global element index).
    # TODO(synk): statistically equivalent to torch's dropout mask, not
    #             bit-identical (different RNG stream).
    row_off = pl.program_id(1) * tile_rows
    col_off = pl.program_id(0) * tile_cols
    rows = lax.broadcasted_iota(jnp.int32, y.shape, 0) + row_off
    cols = lax.broadcasted_iota(jnp.int32, y.shape, 1) + col_off
    idx = rows * jnp.int32(n_cols) + cols          # wraps mod 2^32 for huge tensors (fine for dropout)
    h = _fmix32(idx ^ (seed_ref[0] * _i32(0x9E3779B9)))
    # low 24 bits -> uniform integer in [0, 2^24); keep iff >= p * 2^24
    keep = (h & jnp.int32(0x00FFFFFF)) >= jnp.int32(drop_threshold)
    o_ref[...] = y * jnp.where(keep, jnp.asarray(scale, y.dtype),
                               jnp.asarray(0.0, y.dtype))


# ---------------------------------------------------------------------------
# Tiling heuristics
# ---------------------------------------------------------------------------
def _choose_tiles(n_rows: int, n_cols: int, target_elems: int = 512 * 1024):
    # Row (batch) tile: full extent if small, else a multiple of 8.
    tr = n_rows if n_rows <= 256 else 256
    # Column tile: lane-dense (multiple of 128), ~2 MiB f32 per buffer so the
    # double-buffered in/out blocks stay well under v7x's scoped VMEM budget.
    tc = max(128, (target_elems // max(tr, 1)) // 128 * 128)
    if tc >= n_cols:
        tc = n_cols                                   # full extent is always legal
    return tr, tc


# ---------------------------------------------------------------------------
# Wrapper
# ---------------------------------------------------------------------------
def positional_encoding_forward(x, pe, *, dropout_p=0.1, training=False, seed=0):
    """x: (B, S, D); pe: (max_len, D). Returns dropout(x + pe[:S]) like the module."""
    B, S, D = x.shape
    F = S * D
    # pe broadcasts only over the batch axis, so flatten (S, D) -> F columns.
    # This keeps the output lane-dense even when D < 128.
    xf = x.reshape(B, F)
    pef = pe[:S, :].astype(x.dtype).reshape(1, F)

    TB, TC = _choose_tiles(B, F)
    grid = (pl.cdiv(F, TC), pl.cdiv(B, TB))   # pe-varying axis outermost, B innermost
    out_shape = jax.ShapeDtypeStruct((B, F), x.dtype)
    cparams = pltpu.CompilerParams(dimension_semantics=("parallel", "parallel"))

    if (not training) or dropout_p <= 0.0:
        out = pl.pallas_call(
            pe_add_kernel,
            out_shape=out_shape,
            grid_spec=pltpu.PrefetchScalarGridSpec(
                num_scalar_prefetch=0,
                grid=grid,
                in_specs=[
                    pl.BlockSpec((TB, TC), lambda c, b: (b, c)),
                    pl.BlockSpec((1, TC), lambda c, b: (0, c)),
                ],
                out_specs=pl.BlockSpec((TB, TC), lambda c, b: (b, c)),
            ),
            compiler_params=cparams,
        )(xf, pef)
        return out.reshape(B, S, D)

    p = float(dropout_p)
    drop_threshold = min(int(round(p * (1 << 24))), (1 << 24) - 1)
    kernel = functools.partial(
        pe_add_dropout_kernel,
        drop_threshold=drop_threshold,
        scale=1.0 / (1.0 - p),
        tile_rows=TB, tile_cols=TC, n_cols=F,
    )
    seed_arr = jnp.asarray([seed], dtype=jnp.int32)
    out = pl.pallas_call(
        kernel,
        out_shape=out_shape,
        grid_spec=pltpu.PrefetchScalarGridSpec(
            num_scalar_prefetch=1,
            grid=grid,
            in_specs=[
                pl.BlockSpec((TB, TC), lambda c, b, seed: (b, c)),
                pl.BlockSpec((1, TC), lambda c, b, seed: (0, c)),
            ],
            out_specs=pl.BlockSpec((TB, TC), lambda c, b, seed: (b, c)),
        ),
        compiler_params=cparams,
    )(seed_arr, xf, pef)
    return out.reshape(B, S, D)


if __name__ == "__main__":
    # Small shapes consistent with the module's forward: [batch, seq_len, d_model]
    B, S, D = 2, 8, 32
    MAX_LEN = 64  # stand-in for max_len=5000 (only pe[:S] is used)

    key = jax.random.PRNGKey(0)
    x = jax.random.normal(key, (B, S, D), dtype=jnp.float32)
    pe = make_pe(D, MAX_LEN)

    # Eval-mode forward (dropout = identity): deterministic, check vs reference.
    out = positional_encoding_forward(x, pe, dropout_p=0.1, training=False)
    out = jax.block_until_ready(out)
    ref = x + pe[None, :S, :]
    assert out.shape == (B, S, D)
    assert jnp.allclose(out, ref, atol=1e-6, rtol=1e-6)

    # Training-mode forward: each element is either 0 (dropped) or ref/(1-p).
    p = 0.1
    out_tr = positional_encoding_forward(x, pe, dropout_p=p, training=True, seed=123)
    out_tr = jax.block_until_ready(out_tr)
    assert out_tr.shape == (B, S, D)
    scaled = ref / (1.0 - p)
    ok = jnp.logical_or(out_tr == 0.0,
                        jnp.isclose(out_tr, scaled, atol=1e-5, rtol=1e-5))
    assert bool(jnp.all(ok))

    print("KERNEL_OK")
</pallas_src>

<mosaic_0001>
module attributes {stable_mosaic.version = 11 : i64} {
  func.func @pe_add_kernel(%arg0: i32, %arg1: i32, %arg2: memref<2x256xf32, #tpu.memory_space<vmem>>, %arg3: memref<1x256xf32, #tpu.memory_space<vmem>>, %arg4: memref<2x256xf32, #tpu.memory_space<vmem>>) attributes {dimension_semantics = [#tpu.dimension_semantics<parallel>, #tpu.dimension_semantics<parallel>], iteration_bounds = array<i64: 1, 1>, scalar_prefetch = 0 : i64, scratch_operands = 0 : i64, tpu.core_type = #tpu.core_type<tc>, window_params = [{transform_indices = @transform_0, window_bounds = array<i64: 2, 256>}, {transform_indices = @transform_1, window_bounds = array<i64: 1, 256>}, {transform_indices = @transform_2, window_bounds = array<i64: 2, 256>}]} {
    %c0 = arith.constant 0 : index
    %c0_0 = arith.constant 0 : index
    %0 = vector.load %arg2[%c0, %c0_0] : memref<2x256xf32, #tpu.memory_space<vmem>>, vector<2x256xf32>
    %c0_1 = arith.constant 0 : index
    %c0_2 = arith.constant 0 : index
    %1 = vector.load %arg3[%c0_1, %c0_2] : memref<1x256xf32, #tpu.memory_space<vmem>>, vector<1x256xf32>
    %2 = vector.broadcast %1 : vector<1x256xf32> to vector<2x256xf32>
    %3 = arith.addf %0, %2 : vector<2x256xf32>
    %c0_3 = arith.constant 0 : index
    %c0_4 = arith.constant 0 : index
    %4 = vector.load %arg4[%c0_3, %c0_4] : memref<2x256xf32, #tpu.memory_space<vmem>>, vector<2x256xf32>
    tpu.vector_store %arg4[%c0_3, %c0_4], %3 {strides = array<i32>} : memref<2x256xf32, #tpu.memory_space<vmem>>, vector<2x256xf32>,
    return
  }
  func.func @transform_0(%arg0: i32, %arg1: i32) -> (i32, i32) {
    %c0_i32 = arith.constant 0 : i32
    return %arg1, %arg0 : i32, i32
  }
  func.func @transform_1(%arg0: i32, %arg1: i32) -> (i32, i32) {
    %c0_i32 = arith.constant 0 : i32
    %c0_i32_0 = arith.constant 0 : i32
    return %c0_i32, %arg0 : i32, i32
  }
  func.func @transform_2(%arg0: i32, %arg1: i32) -> (i32, i32) {
    %c0_i32 = arith.constant 0 : i32
    return %arg1, %arg0 : i32, i32
  }
}

</mosaic_0001>

<llo_original>
// kernel: tpu_custom_call.1
$region0: #{tpu_custom_call.1}
  #allocation0 [shape = 'u32[]', space=smem, size = 0x4, offset = 0x4, fixed_abs, tag = 'smem constant byte address 0x4 - core index']
  #allocation1 [shape = 'u32[144,128]{1,0:T(1,128)}', space=vmem, size = 0x12000, scoped, tag = 'internal scratch']
  %s0 = inlined_call_operand.hbm [shape: f32[2,256], index: 0, kind: input, shape index: {}]
  %s1 = inlined_call_operand.vmem [shape: f32[1,256], index: 1, kind: input, shape index: {}]
  %s2 = inlined_call_operand.hbm [shape: f32[2,256], index: 2, kind: output, shape index: {}]
  %s3 = sld [smem:[#allocation0]]
  $region22: #{tpu_custom_call.1} parent=0
    _
  %s5 = ssub.s32 1, %s3
  %s6 = scalar_select 0, %s5, %s3
  $region1: #{tpu_custom_call.1} parent=0
    #allocation2 [shape = 'u8[2048]{0}', space=vmem, size = 0x800, scoped, tag = 'input window, operand 0, single buffered']
    #allocation3 [shape = 's32[1]{0}', space=sflag, size = 0x4, scoped, tag = 'scoped memory for tpu_custom_call.1']
    #allocation4 [shape = 's32[1]{0}', space=sflag, size = 0x4, scoped, tag = 'scoped memory for tpu_custom_call.1']
    #allocation5 [shape = 'u8[2048]{0}', space=vmem, size = 0x800, scoped, tag = 'output window, operand 0, single buffered']
    %7 = vsyncpa [#allocation3], 0
    %8 = vsyncpa [#allocation4], 0
    // Predicated region
    $region2: #{tpu_custom_call.1} parent=1 // pred_check
      _
    $region3: #{tpu_custom_call.1} parent=1 // pred_check_branch
      %10 = sbr.rel (0) target = $region5
    $region4: #{tpu_custom_call.1} parent=1 // pred_region
      %s12 = ssub.s32 64, 64
      %13 = vsyncadd [#allocation3], %s12
      %s15 = sshll.u32 [#allocation2], 4
      %s16 = int_to_ptr.vmem [resolvable:$true] %s15
      %18 = dma.hbm_to_vmem [thread:$0]  %s0, 64, %s16, [#allocation3]
    $region5: #{tpu_custom_call.1} parent=1 // pred_fallthru
      _
    // Predicated region
    $region6: #{tpu_custom_call.1} parent=1 // pred_check
      _
    $region7: #{tpu_custom_call.1} parent=1 // pred_check_branch
      %20 = sbr.rel (0) target = $region9
    $region8: #{tpu_custom_call.1} parent=1 // pred_region
      _
    $region9: #{tpu_custom_call.1} parent=1 // pred_fallthru
      _
    // Predicated region
    $region10: #{tpu_custom_call.1} parent=1 // pred_check
      _
    $region11: #{tpu_custom_call.1} parent=1 // pred_check_branch
      %22 = sbr.rel (0) target = $region13
    $region12: #{tpu_custom_call.1} parent=1 // pred_region
      %23 = dma.done [#allocation3], 64
    $region13: #{tpu_custom_call.1} parent=1 // pred_fallthru
      _
    %v24 = vld [vmem:[#allocation2] sm:$0xf]
    %v25 = vld [vmem:[%s1] sm:$0x3]
    %v27 = vlaneseq
    %v28 = vshrl.u32 %v27, 7
    %v29 = vsub.s32 0, %v28
    %v30 = vrot.slane %v25, %v29
    %v31 = vlaneseq
    %v32 = vshrl.u32 %v31, 7
    %v33 = vsub.s32 1, %v32
    %v34 = vrot.slane %v25, %v33
    %v35 = vcombine.low %v30, %v34
    %v37 = vunpack.c.l.s4 1983009808
    %v38 = vunpack.c.0.s8 %v37
    %v39 = vlaneseq
    %v40 = vshrl.u32 %v39, 7
    %v41 = vsub.s32 %v38, %v40
    %v42 = vrot.slane %v35, %v41
    %v44 = vadd.f32 %v24, %v42
    %45 = vst [vmem:[#allocation5] sm:$0xf] %v44
    // Predicated region
    $region14: #{tpu_custom_call.1} parent=1 // pred_check
      _
    $region15: #{tpu_custom_call.1} parent=1 // pred_check_branch
      %47 = sbr.rel (0) target = $region17
    $region16: #{tpu_custom_call.1} parent=1 // pred_region
      %s49 = ssub.s32 64, 64
      %50 = vsyncadd [#allocation4], %s49
      %s52 = sshll.u32 [#allocation5], 4
      %s53 = int_to_ptr.vmem [resolvable:$true] %s52
      %55 = dma.vmem_to_hbm [thread:$0]  %s53, 64, %s2, [#allocation4]
    $region17: #{tpu_custom_call.1} parent=1 // pred_fallthru
      _
    // Predicated region
    $region18: #{tpu_custom_call.1} parent=1 // pred_check
      _
    $region19: #{tpu_custom_call.1} parent=1 // pred_check_branch
      %57 = sbr.rel (0) target = $region21
    $region20: #{tpu_custom_call.1} parent=1 // pred_region
      %58 = dma.done [#allocation4], 64
    $region21: #{tpu_custom_call.1} parent=1 // pred_fallthru
      _
    %59 = vsyncpa [#allocation3], 1
    %60 = vsyncpa [#allocation4], 1

</llo_original>
